<compile_context>
chip_gen: v5e
topology: v5e:2x2
jax: 0.10.0
libtpu: 0.0.40
codegen_flags: <defaults>
</compile_context>

<pallas_src>
import jax
import jax.numpy as jnp
from jax import lax
from jax.experimental import pallas as pl
from jax.experimental.pallas import tpu as pltpu


def _t2i_final_kernel(x_ref, t_ref, tbl_ref, w_ref, b_ref, o_ref):
    # x_ref: (TN, H)  t_ref: (1, H)  tbl_ref: (2, H)
    # w_ref: (H, O_pad)  b_ref: (1, O_pad)  o_ref: (TN, O_pad)
    x = x_ref[...].astype(jnp.float32)
    h = x.shape[-1]

    # One-pass LayerNorm stats: biased variance, eps = 1e-6, no affine.
    inv_h = 1.0 / h
    mean = jnp.sum(x, axis=-1, keepdims=True) * inv_h          # (TN, 1)
    ex2 = jnp.sum(x * x, axis=-1, keepdims=True) * inv_h       # (TN, 1)
    var = ex2 - mean * mean
    inv_std = lax.rsqrt(var + 1e-6)                            # (TN, 1)

    # shift / scale = scale_shift_table + t  (per-batch, handled by grid axis 0)
    tvec = t_ref[...].astype(jnp.float32)                      # (1, H)
    tbl = tbl_ref[...].astype(jnp.float32)                     # (2, H)
    shift = tbl[0:1, :] + tvec                                 # (1, H)
    scale1 = 1.0 + tbl[1:2, :] + tvec                          # (1, H) == 1 + scale

    # Fused LN + modulation:  y = (x - mean)*inv_std*(1+scale) + shift
    #                           = x*a + (shift - mean*a),  a = inv_std*(1+scale)
    a = inv_std * scale1                                       # (TN, H)
    y = x * a + (shift - mean * a)                             # (TN, H)

    # Final linear projection on the MXU (lane-dense padded output width).
    w = w_ref[...]
    if w.dtype == jnp.bfloat16:
        y = y.astype(jnp.bfloat16)                             # native bf16 MXU path
    else:
        w = w.astype(jnp.float32)
    out = jnp.dot(y, w, preferred_element_type=jnp.float32)    # (TN, O_pad)
    out = out + b_ref[...].astype(jnp.float32)
    o_ref[...] = out.astype(o_ref.dtype)


def t2i_final_layer(x, t, scale_shift_table, w_t, bias, *, tn=None):
    """x: [B, N, H], t: [B, H], scale_shift_table: [2, H], w_t: [H, O], bias: [O]."""
    B, N, H = x.shape
    H_w, O = w_t.shape
    assert H_w == H
    out_dtype = x.dtype

    # --- Lane-dense output: pad O up to a multiple of 128 (sliced off below). ---
    O_pad = ((O + 127) // 128) * 128
    if O_pad != O:
        w_t = jnp.pad(w_t, ((0, 0), (0, O_pad - O)))
        bias = jnp.pad(bias, (0, O_pad - O))

    # --- Token tile: multiple of the sublane packing, capped for VMEM budget ---
    # (TN <= 512 keeps 2x(TN,H) f32 input buffers + resident (H,O_pad) weight +
    #  2x(TN,O_pad) output buffers well under the scoped VMEM limit on all of
    #  v5e / v6e / v7x while amortizing the ~0.35us/step overhead).
    sub = 16 if x.dtype == jnp.bfloat16 else 8
    if tn is None:
        tn = min(512, max(sub, ((N + sub - 1) // sub) * sub))
    tn = max(sub, (tn // sub) * sub)
    N_pad = ((N + tn - 1) // tn) * tn
    if N_pad != N:
        x = jnp.pad(x, ((0, 0), (0, N_pad - N), (0, 0)))
    n_tiles = N_pad // tn

    t3 = t.reshape(B, 1, H)
    bias2 = bias.reshape(1, O_pad)

    out = pl.pallas_call(
        _t2i_final_kernel,
        out_shape=jax.ShapeDtypeStruct((B, N_pad, O_pad), out_dtype),
        grid_spec=pltpu.PrefetchScalarGridSpec(
            num_scalar_prefetch=0,
            grid=(B, n_tiles),
            in_specs=[
                pl.BlockSpec((None, tn, H), lambda b, n: (b, n, 0)),   # x  -> (TN, H)
                pl.BlockSpec((None, 1, H), lambda b, n: (b, 0, 0)),    # t  -> (1, H)
                pl.BlockSpec((2, H), lambda b, n: (0, 0)),             # table (resident)
                pl.BlockSpec((H, O_pad), lambda b, n: (0, 0)),         # weight (resident)
                pl.BlockSpec((1, O_pad), lambda b, n: (0, 0)),         # bias (resident)
            ],
            out_specs=pl.BlockSpec((None, tn, O_pad), lambda b, n: (b, n, 0)),
        ),
        compiler_params=pltpu.CompilerParams(
            dimension_semantics=("parallel", "parallel"),   # B x N-tiles shard across TCs
            vmem_limit_bytes=32 * 1024 * 1024,              # raise v5e's 16 MiB default
        ),
    )(x, t3, scale_shift_table, w_t, bias2)

    return out[:, :N, :O]


def _reference(x, t, scale_shift_table, w_t, bias):
    mean = jnp.mean(x, axis=-1, keepdims=True)
    var = jnp.mean((x - mean) ** 2, axis=-1, keepdims=True)
    xn = (x - mean) / jnp.sqrt(var + 1e-6)
    shift = (scale_shift_table[0][None] + t)[:, None, :]
    scale = (scale_shift_table[1][None] + t)[:, None, :]
    y = xn * (1.0 + scale) + shift
    return y @ w_t + bias[None, None, :]


if __name__ == "__main__":
    # Small shapes consistent with the module.
    B, N, H = 2, 8, 32
    patch_size, out_channels = 2, 4
    O = patch_size * patch_size * out_channels  # 16

    key = jax.random.PRNGKey(0)
    k_x, k_t, k_tbl, k_w, k_b = jax.random.split(key, 5)

    x = jax.random.normal(k_x, (B, N, H), dtype=jnp.float32)
    t = jax.random.normal(k_t, (B, H), dtype=jnp.float32)

    # Deterministic "init": scale_shift_table ~ randn / sqrt(H);
    # Linear init ~ U(-1/sqrt(H), 1/sqrt(H)) like nn.Linear defaults.
    scale_shift_table = jax.random.normal(k_tbl, (2, H), dtype=jnp.float32) / (H ** 0.5)
    bound = 1.0 / (H ** 0.5)
    w = jax.random.uniform(k_w, (O, H), minval=-bound, maxval=bound, dtype=jnp.float32)
    bias = jax.random.uniform(k_b, (O,), minval=-bound, maxval=bound, dtype=jnp.float32)
    w_t = w.T  # pre-transpose to [H, O] for the kernel

    out = t2i_final_layer(x, t, scale_shift_table, w_t, bias)
    out = jax.block_until_ready(out)

    ref = _reference(x, t, scale_shift_table, w_t, bias)
    assert out.shape == (B, N, O)
    assert jnp.allclose(out, ref, atol=1e-4, rtol=1e-4), "mismatch vs pure-JAX reference"

    print("KERNEL_OK")
</pallas_src>

<mosaic_0001>
module attributes {stable_mosaic.version = 11 : i64} {
  func.func @_t2i_final_kernel(%arg0: i32, %arg1: i32, %arg2: memref<1x8x32xf32, #tpu.memory_space<vmem>>, %arg3: memref<1x1x32xf32, #tpu.memory_space<vmem>>, %arg4: memref<2x32xf32, #tpu.memory_space<vmem>>, %arg5: memref<32x128xf32, #tpu.memory_space<vmem>>, %arg6: memref<1x128xf32, #tpu.memory_space<vmem>>, %arg7: memref<1x8x128xf32, #tpu.memory_space<vmem>>) attributes {dimension_semantics = [#tpu.dimension_semantics<parallel>, #tpu.dimension_semantics<parallel>], iteration_bounds = array<i64: 2, 1>, scalar_prefetch = 0 : i64, scratch_operands = 0 : i64, tpu.core_type = #tpu.core_type<tc>, window_params = [{transform_indices = @transform_0, window_bounds = array<i64: 1, 8, 32>}, {transform_indices = @transform_1, window_bounds = array<i64: 1, 1, 32>}, {pipeline_mode = #tpu.pipeline_mode<synchronous>, transform_indices = @transform_2, window_bounds = array<i64: 2, 32>}, {pipeline_mode = #tpu.pipeline_mode<synchronous>, transform_indices = @transform_3, window_bounds = array<i64: 32, 128>}, {pipeline_mode = #tpu.pipeline_mode<synchronous>, transform_indices = @transform_4, window_bounds = array<i64: 1, 128>}, {transform_indices = @transform_5, window_bounds = array<i64: 1, 8, 128>}]} {
    %c0 = arith.constant 0 : index
    %c0_0 = arith.constant 0 : index
    %c0_1 = arith.constant 0 : index
    %0 = vector.load %arg2[%c0, %c0_0, %c0_1] : memref<1x8x32xf32, #tpu.memory_space<vmem>>, vector<1x8x32xf32>
    %1 = vector.shape_cast %0 : vector<1x8x32xf32> to vector<8x32xf32>
    %cst = arith.constant dense<0.000000e+00> : vector<8xf32>
    %2 = vector.multi_reduction <add>, %1, %cst [1] : vector<8x32xf32> to vector<8xf32>
    %3 = vector.shape_cast %2 : vector<8xf32> to vector<8x1xf32>
    %cst_2 = arith.constant 3.125000e-02 : f32
    %4 = vector.broadcast %cst_2 : f32 to vector<8x1xf32>
    %5 = arith.mulf %3, %4 : vector<8x1xf32>
    %6 = arith.mulf %1, %1 : vector<8x32xf32>
    %cst_3 = arith.constant dense<0.000000e+00> : vector<8xf32>
    %7 = vector.multi_reduction <add>, %6, %cst_3 [1] : vector<8x32xf32> to vector<8xf32>
    %8 = vector.shape_cast %7 : vector<8xf32> to vector<8x1xf32>
    %cst_4 = arith.constant 3.125000e-02 : f32
    %9 = vector.broadcast %cst_4 : f32 to vector<8x1xf32>
    %10 = arith.mulf %8, %9 : vector<8x1xf32>
    %11 = arith.mulf %5, %5 : vector<8x1xf32>
    %12 = arith.subf %10, %11 : vector<8x1xf32>
    %cst_5 = arith.constant 9.99999997E-7 : f32
    %13 = vector.broadcast %cst_5 : f32 to vector<8x1xf32>
    %14 = arith.addf %12, %13 : vector<8x1xf32>
    %15 = math.rsqrt %14 : vector<8x1xf32>
    %c0_6 = arith.constant 0 : index
    %c0_7 = arith.constant 0 : index
    %c0_8 = arith.constant 0 : index
    %16 = vector.load %arg3[%c0_6, %c0_7, %c0_8] : memref<1x1x32xf32, #tpu.memory_space<vmem>>, vector<1x1x32xf32>
    %17 = vector.shape_cast %16 : vector<1x1x32xf32> to vector<1x32xf32>
    %c0_9 = arith.constant 0 : index
    %c0_10 = arith.constant 0 : index
    %18 = vector.load %arg4[%c0_9, %c0_10] : memref<2x32xf32, #tpu.memory_space<vmem>>, vector<2x32xf32>
    %19 = vector.extract_strided_slice %18 {offsets = [0, 0], sizes = [1, 32], strides = [1, 1]} : vector<2x32xf32> to vector<1x32xf32>
    %20 = arith.addf %19, %17 : vector<1x32xf32>
    %21 = vector.extract_strided_slice %18 {offsets = [1, 0], sizes = [1, 32], strides = [1, 1]} : vector<2x32xf32> to vector<1x32xf32>
    %cst_11 = arith.constant 1.000000e+00 : f32
    %22 = vector.broadcast %cst_11 : f32 to vector<1x32xf32>
    %23 = arith.addf %22, %21 : vector<1x32xf32>
    %24 = arith.addf %23, %17 : vector<1x32xf32>
    %25 = vector.broadcast %15 : vector<8x1xf32> to vector<8x32xf32>
    %26 = vector.broadcast %24 : vector<1x32xf32> to vector<8x32xf32>
    %27 = arith.mulf %25, %26 : vector<8x32xf32>
    %28 = arith.mulf %1, %27 : vector<8x32xf32>
    %29 = vector.broadcast %5 : vector<8x1xf32> to vector<8x32xf32>
    %30 = arith.mulf %29, %27 : vector<8x32xf32>
    %31 = vector.broadcast %20 : vector<1x32xf32> to vector<8x32xf32>
    %32 = arith.subf %31, %30 : vector<8x32xf32>
    %33 = arith.addf %28, %32 : vector<8x32xf32>
    %c0_12 = arith.constant 0 : index
    %c0_13 = arith.constant 0 : index
    %34 = vector.load %arg5[%c0_12, %c0_13] : memref<32x128xf32, #tpu.memory_space<vmem>>, vector<32x128xf32>
    %cst_14 = arith.constant dense<0.000000e+00> : vector<8x128xf32>
    %35 = tpu.matmul %33, %34, %cst_14 {dimension_numbers = #tpu.dot_dimension_numbers<[1], [0], [0], [1], [0, 0, 1, 1], [], []>} : vector<8x32xf32>, vector<32x128xf32>, vector<8x128xf32> -> vector<8x128xf32>
    %c0_15 = arith.constant 0 : index
    %c0_16 = arith.constant 0 : index
    %36 = vector.load %arg6[%c0_15, %c0_16] : memref<1x128xf32, #tpu.memory_space<vmem>>, vector<1x128xf32>
    %37 = vector.broadcast %36 : vector<1x128xf32> to vector<8x128xf32>
    %38 = arith.addf %35, %37 : vector<8x128xf32>
    %c0_17 = arith.constant 0 : index
    %c0_18 = arith.constant 0 : index
    %c0_19 = arith.constant 0 : index
    %39 = vector.load %arg7[%c0_17, %c0_18, %c0_19] : memref<1x8x128xf32, #tpu.memory_space<vmem>>, vector<1x8x128xf32>
    %40 = vector.shape_cast %39 : vector<1x8x128xf32> to vector<8x128xf32>
    %41 = vector.shape_cast %38 : vector<8x128xf32> to vector<1x8x128xf32>
    tpu.vector_store %arg7[%c0_17, %c0_18, %c0_19], %41 {strides = array<i32>} : memref<1x8x128xf32, #tpu.memory_space<vmem>>, vector<1x8x128xf32>,
    return
  }
  func.func @transform_0(%arg0: i32, %arg1: i32) -> (i32, i32, i32) {
    %c0_i32 = arith.constant 0 : i32
    %c0_i32_0 = arith.constant 0 : i32
    return %arg0, %arg1, %c0_i32 : i32, i32, i32
  }
  func.func @transform_1(%arg0: i32, %arg1: i32) -> (i32, i32, i32) {
    %c0_i32 = arith.constant 0 : i32
    %c0_i32_0 = arith.constant 0 : i32
    %c0_i32_1 = arith.constant 0 : i32
    return %arg0, %c0_i32, %c0_i32_0 : i32, i32, i32
  }
  func.func @transform_2(%arg0: i32, %arg1: i32) -> (i32, i32) {
    %c0_i32 = arith.constant 0 : i32
    %c0_i32_0 = arith.constant 0 : i32
    %c0_i32_1 = arith.constant 0 : i32
    return %c0_i32, %c0_i32_0 : i32, i32
  }
  func.func @transform_3(%arg0: i32, %arg1: i32) -> (i32, i32) {
    %c0_i32 = arith.constant 0 : i32
    %c0_i32_0 = arith.constant 0 : i32
    %c0_i32_1 = arith.constant 0 : i32
    return %c0_i32, %c0_i32_0 : i32, i32
  }
  func.func @transform_4(%arg0: i32, %arg1: i32) -> (i32, i32) {
    %c0_i32 = arith.constant 0 : i32
    %c0_i32_0 = arith.constant 0 : i32
    %c0_i32_1 = arith.constant 0 : i32
    return %c0_i32, %c0_i32_0 : i32, i32
  }
  func.func @transform_5(%arg0: i32, %arg1: i32) -> (i32, i32, i32) {
    %c0_i32 = arith.constant 0 : i32
    %c0_i32_0 = arith.constant 0 : i32
    return %arg0, %arg1, %c0_i32 : i32, i32, i32
  }
}

</mosaic_0001>

<llo_original>
// kernel: tpu_custom_call.1
$region0: #{tpu_custom_call.1}
  #allocation0 [shape = 'u32[]', space=smem, size = 0x4, offset = 0x4, fixed_abs, tag = 'smem constant byte address 0x4 - core index']
  #allocation1 [shape = 'u32[72,128]{1,0:T(1,128)}', space=vmem, size = 0x9000, scoped, tag = 'internal scratch']
  %s0 = inlined_call_operand.hbm [shape: f32[2,8,32], index: 0, kind: input, shape index: {}]
  %s1 = inlined_call_operand.hbm [shape: f32[2,1,32], index: 1, kind: input, shape index: {}]
  %s2 = inlined_call_operand.hbm [shape: f32[2,32], index: 2, kind: input, shape index: {}]
  %s3 = inlined_call_operand.hbm [shape: f32[32,128], index: 3, kind: input, shape index: {}]
  %s4 = inlined_call_operand.vmem [shape: f32[1,128], index: 4, kind: input, shape index: {}]
  %s5 = inlined_call_operand.hbm [shape: f32[2,8,128], index: 5, kind: output, shape index: {}]
  %s6 = sld [smem:[#allocation0]]
  $region69: #{tpu_custom_call.1} parent=0
    _
  %s8 = ssub.s32 1, %s6
  %s9 = scalar_select 0, %s8, %s6
  $region1: #{tpu_custom_call.1} parent=0
    #allocation2 [shape = 'u8[8192]{0}', space=vmem, size = 0x2000, scoped, tag = 'input window, operand 0']
    #allocation3 [shape = 's32[2]{0}', space=sflag, size = 0x8, scoped, tag = 'scoped memory for tpu_custom_call.1']
    #allocation4 [shape = 's32[2]{0}', space=sflag, size = 0x8, scoped, tag = 'scoped memory for tpu_custom_call.1']
    #allocation5 [shape = 'u8[1024]{0}', space=vmem, size = 0x400, scoped, tag = 'input window, operand 1']
    #allocation6 [shape = 's32[2]{0}', space=sflag, size = 0x8, scoped, tag = 'scoped memory for tpu_custom_call.1']
    #allocation7 [shape = 'u8[1024]{0}', space=vmem, size = 0x400, scoped, tag = 'input window, operand 2, single buffered']
    #allocation8 [shape = 'u8[16384]{0}', space=vmem, size = 0x4000, scoped, tag = 'input window, operand 3, single buffered']
    #allocation9 [shape = 's32[1]{0}', space=sflag, size = 0x4, scoped, tag = 'scoped memory for tpu_custom_call.1']
    #allocation10 [shape = 'u8[8192]{0}', space=vmem, size = 0x2000, scoped, tag = 'output window, operand 0']
    %10 = vsyncpa [#allocation3], 0
    %s11 = scalar_lea.sflag [#allocation3], 1
    %12 = vsyncpa %s11, 0
    %13 = vsyncpa [#allocation6], 0
    %s14 = scalar_lea.sflag [#allocation6], 1
    %15 = vsyncpa %s14, 0
    %16 = vsyncpa [#allocation9], 0
    %17 = vsyncpa [#allocation4], 0
    %s18 = scalar_lea.sflag [#allocation4], 1
    %19 = vsyncpa %s18, 0
    loop: start=0, step=1, limit=4
    $region2: #{tpu_custom_call.1} parent=1 // loop_pre_header
      _
    $region3: #{tpu_custom_call.1} parent=1 // loop_header
      %s21 = sphi 0, %s25
      %p22 = scmp.ge.s32.totalorder %s21, 4
      %s28 = sphi 0, %s40
      %s29 = sphi 0, %s36
      %s30 = sphi 0, %s28
      %s31 = sphi 0, %s29
      %s32 = sphi 0, %s30
      %s33 = sphi 0, %s31
      %s45 = sphi 0, %s47
      %s48 = sphi 0, %s45
      %s49 = sphi 0, %s48
      %s65 = sphi 0, %s49
      %s71 = sphi 0, %s73
      %s74 = sphi 0, %s71
      %s75 = sphi 0, %s74
      %s91 = sphi 0, %s75
      %s95 = sphi 0, %s95
      %s97 = sphi 0, %s95
      %s98 = sphi 0, %s97
      %s112 = sphi 0, %s98
      %s116 = sphi 0, %s116
      %s118 = sphi 0, %s116
      %s119 = sphi 0, %s118
      %s133 = sphi 0, %s119
      %s137 = sphi 0, %s137
      %s139 = sphi 0, %s137
      %s140 = sphi 0, %s139
      %s154 = sphi 0, %s140
      %s162 = sphi 0, %s164
      %s165 = sphi 0, %s162
      %s166 = sphi 0, %s165
      %s182 = sphi 0, %s166
    $region4: #{tpu_custom_call.1} parent=1 // loop_header_branch
      %24 = sbr.rel (%p22) target = $region8
    $region5: #{tpu_custom_call.1} parent=1 // loop_body
      %s26 = ssub.s32 %s21, 1
      %s27 = ssub.s32 %s21, 2
      %s34 = sadd.s32 1, %s29
      %p35 = scmp.ge.s32.totalorder %s34, 1
      %s36 = scalar_select %p35, 0, %s34
      %s37 = sadd.s32 1, %s28
      %s38 = scalar_select %p35, %s37, %s28
      %p39 = scmp.ge.s32.totalorder %s38, 2
      %s40 = scalar_select %p39, 0, %s38
      %s41 = ssub.s32 %s28, %s40
      %s42 = ssub.s32 %s29, %s36
      %s43 = sor.u32 %s41, %s42
      %p44 = scmp.eq.s32.totalorder %s43, 0
      %s46 = sadd.s32 %s45, 1
      %s47 = scalar_select %p44, %s45, %s46
      %p50 = pneg %p44
      %p51 = scmp.eq.s32.totalorder %s21, 1
      %p52 = por %p50, %p51
      %p53 = scmp.ne.s32.totalorder %s45, %s48
      %p54 = scmp.eq.s32.totalorder %s21, 0
      %p55 = por %p53, %p54
      %p56 = scmp.ne.s32.totalorder %s45, %s48
      %p57 = scmp.eq.s32.totalorder %s26, 1
      %p58 = por %p56, %p57
      %p59 = scmp.ne.s32.totalorder %s48, %s49
      %p60 = scmp.eq.s32.totalorder %s26, 0
      %p61 = por %p59, %p60
      %p62 = scmp.ne.s32.totalorder %s48, %s49
      %p63 = scmp.eq.s32.totalorder %s27, 1
      %p64 = por %p62, %p63
      %p66 = scmp.ne.s32.totalorder %s49, %s65
      %p67 = scmp.eq.s32.totalorder %s27, 0
      %p68 = por %p66, %p67
      %s69 = ssub.s32 %s28, %s40
      %p70 = scmp.eq.s32.totalorder %s69, 0
      %s72 = sadd.s32 %s71, 1
      %s73 = scalar_select %p70, %s71, %s72
      %p76 = pneg %p70
      %p77 = scmp.eq.s32.totalorder %s21, 1
      %p78 = por %p76, %p77
      %p79 = scmp.ne.s32.totalorder %s71, %s74
      %p80 = scmp.eq.s32.totalorder %s21, 0
      %p81 = por %p79, %p80
      %p82 = scmp.ne.s32.totalorder %s71, %s74
      %p83 = scmp.eq.s32.totalorder %s26, 1
      %p84 = por %p82, %p83
      %p85 = scmp.ne.s32.totalorder %s74, %s75
      %p86 = scmp.eq.s32.totalorder %s26, 0
      %p87 = por %p85, %p86
      %p88 = scmp.ne.s32.totalorder %s74, %s75
      %p89 = scmp.eq.s32.totalorder %s27, 1
      %p90 = por %p88, %p89
      %p92 = scmp.ne.s32.totalorder %s75, %s91
      %p93 = scmp.eq.s32.totalorder %s27, 0
      %p94 = por %p92, %p93
      %s96 = sadd.s32 %s95, 1
      %p99 = scmp.eq.s32.totalorder %s21, 1
      %p100 = scmp.ne.s32.totalorder %s95, %s97
      %p101 = scmp.eq.s32.totalorder %s21, 0
      %p102 = por %p100, %p101
      %p103 = scmp.ne.s32.totalorder %s95, %s97
      %p104 = scmp.eq.s32.totalorder %s26, 1
      %p105 = por %p103, %p104
      %p106 = scmp.ne.s32.totalorder %s97, %s98
      %p107 = scmp.eq.s32.totalorder %s26, 0
      %p108 = por %p106, %p107
      %p109 = scmp.ne.s32.totalorder %s97, %s98
      %p110 = scmp.eq.s32.totalorder %s27, 1
      %p111 = por %p109, %p110
      %p113 = scmp.ne.s32.totalorder %s98, %s112
      %p114 = scmp.eq.s32.totalorder %s27, 0
      %p115 = por %p113, %p114
      %s117 = sadd.s32 %s116, 1
      %p120 = scmp.eq.s32.totalorder %s21, 1
      %p121 = scmp.ne.s32.totalorder %s116, %s118
      %p122 = scmp.eq.s32.totalorder %s21, 0
      %p123 = por %p121, %p122
      %p124 = scmp.ne.s32.totalorder %s116, %s118
      %p125 = scmp.eq.s32.totalorder %s26, 1
      %p126 = por %p124, %p125
      %p127 = scmp.ne.s32.totalorder %s118, %s119
      %p128 = scmp.eq.s32.totalorder %s26, 0
      %p129 = por %p127, %p128
      %p130 = scmp.ne.s32.totalorder %s118, %s119
      %p131 = scmp.eq.s32.totalorder %s27, 1
      %p132 = por %p130, %p131
      %p134 = scmp.ne.s32.totalorder %s119, %s133
      %p135 = scmp.eq.s32.totalorder %s27, 0
      %p136 = por %p134, %p135
      %s138 = sadd.s32 %s137, 1
      %p141 = scmp.eq.s32.totalorder %s21, 1
      %p142 = scmp.ne.s32.totalorder %s137, %s139
      %p143 = scmp.eq.s32.totalorder %s21, 0
      %p144 = por %p142, %p143
      %p145 = scmp.ne.s32.totalorder %s137, %s139
      %p146 = scmp.eq.s32.totalorder %s26, 1
      %p147 = por %p145, %p146
      %p148 = scmp.ne.s32.totalorder %s139, %s140
      %p149 = scmp.eq.s32.totalorder %s26, 0
      %p150 = por %p148, %p149
      %p151 = scmp.ne.s32.totalorder %s139, %s140
      %p152 = scmp.eq.s32.totalorder %s27, 1
      %p153 = por %p151, %p152
      %p155 = scmp.ne.s32.totalorder %s140, %s154
      %p156 = scmp.eq.s32.totalorder %s27, 0
      %p157 = por %p155, %p156
      %s158 = ssub.s32 %s28, %s40
      %s159 = ssub.s32 %s29, %s36
      %s160 = sor.u32 %s158, %s159
      %p161 = scmp.eq.s32.totalorder %s160, 0
      %s163 = sadd.s32 %s162, 1
      %s164 = scalar_select %p161, %s162, %s163
      %p167 = pneg %p161
      %p168 = scmp.eq.s32.totalorder %s21, 1
      %p169 = por %p167, %p168
      %p170 = scmp.ne.s32.totalorder %s162, %s165
      %p171 = scmp.eq.s32.totalorder %s21, 0
      %p172 = por %p170, %p171
      %p173 = scmp.ne.s32.totalorder %s162, %s165
      %p174 = scmp.eq.s32.totalorder %s26, 1
      %p175 = por %p173, %p174
      %p176 = scmp.ne.s32.totalorder %s165, %s166
      %p177 = scmp.eq.s32.totalorder %s26, 0
      %p178 = por %p176, %p177
      %p179 = scmp.ne.s32.totalorder %s165, %s166
      %p180 = scmp.eq.s32.totalorder %s27, 1
      %p181 = por %p179, %p180
      %p183 = scmp.ne.s32.totalorder %s166, %s182
      %p184 = scmp.eq.s32.totalorder %s27, 0
      %p185 = por %p183, %p184
      %p186 = scmp.le.s32.totalorder 1, %s21
      %p187 = scmp.lt.s32.totalorder %s21, 3
      %p188 = pnand %p186, %p187
      %p189 = pneg %p188
      // Predicated region
      $region9: #{tpu_custom_call.1} parent=5 // pred_check
        _
      $region10: #{tpu_custom_call.1} parent=5 // pred_check_branch
        %191 = sbr.rel (%p188) target = $region12
      $region11: #{tpu_custom_call.1} parent=5 // pred_region
        %s192 = ssub.s32 %s21, 1
        // Predicated region
        $region13: #{tpu_custom_call.1} parent=11 // pred_check
          %p193 = pneg %p108
        $region14: #{tpu_custom_call.1} parent=11 // pred_check_branch
          %195 = sbr.rel (%p193) target = $region16
        $region15: #{tpu_custom_call.1} parent=11 // pred_region
          %197 = vsyncadd [#allocation6], 0
          %s199 = sshll.u32 %s2, 4
          %s200 = int_to_ptr.hbm [resolvable:$true] %s199
          %s201 = sshll.u32 [#allocation7], 4
          %s202 = int_to_ptr.vmem [resolvable:$true] %s201
          %204 = dma.hbm_to_vmem [thread:$0]  %s200, 32, %s202, [#allocation6]
        $region16: #{tpu_custom_call.1} parent=11 // pred_fallthru
          _
        // Predicated region
        $region17: #{tpu_custom_call.1} parent=11 // pred_check
          %p205 = pneg %p129
        $region18: #{tpu_custom_call.1} parent=11 // pred_check_branch
          %207 = sbr.rel (%p205) target = $region20
        $region19: #{tpu_custom_call.1} parent=11 // pred_region
          %209 = vsyncadd [#allocation9], 0
          %s210 = sshll.u32 %s3, 4
          %s211 = int_to_ptr.hbm [resolvable:$true] %s210
          %s212 = sshll.u32 [#allocation8], 4
          %s213 = int_to_ptr.vmem [resolvable:$true] %s212
          %218 = dma.hbm_to_vmem [thread:$0]  %s211, 512, %s213, [#allocation9], 128, 128, 8
        $region20: #{tpu_custom_call.1} parent=11 // pred_fallthru
          _
        // Predicated region
        $region21: #{tpu_custom_call.1} parent=11 // pred_check
          %p219 = pneg %p150
        $region22: #{tpu_custom_call.1} parent=11 // pred_check_branch
          %221 = sbr.rel (%p219) target = $region24
        $region23: #{tpu_custom_call.1} parent=11 // pred_region
          _
        $region24: #{tpu_custom_call.1} parent=11 // pred_fallthru
          _
      $region12: #{tpu_custom_call.1} parent=5 // pred_fallthru
        _
      %p222 = scmp.lt.s32.totalorder %s21, 2
      // Predicated region
      $region25: #{tpu_custom_call.1} parent=5 // pred_check
        %p223 = pneg %p222
      $region26: #{tpu_custom_call.1} parent=5 // pred_check_branch
        %225 = sbr.rel (%p223) target = $region28
      $region27: #{tpu_custom_call.1} parent=5 // pred_region
        // Predicated region
        $region29: #{tpu_custom_call.1} parent=27 // pred_check
          %p226 = pneg %p55
        $region30: #{tpu_custom_call.1} parent=27 // pred_check_branch
          %228 = sbr.rel (%p226) target = $region32
        $region31: #{tpu_custom_call.1} parent=27 // pred_region
          %s229 = sand.u32 %s45, 1
          %s230 = scalar_lea.sflag [#allocation3], %s229
          %s231 = sand.u32 %s45, 1
          %s232 = smul.addr %s231, 8
          %s233 = scalar_lea.vmem [#allocation2], %s232
          %235 = vsyncadd %s230, 0
          %s236 = sadd.s32 %s29, %s28
          %s237 = smul.addr %s236, 8
          %s238 = scalar_lea.hbm %s0, %s237
          %s240 = sshll.u32 %s238, 4
          %s241 = int_to_ptr.hbm [resolvable:$true] %s240
          %s242 = sshll.u32 %s233, 4
          %s243 = int_to_ptr.vmem [resolvable:$true] %s242
          %245 = dma.hbm_to_vmem [thread:$0]  %s241, 128, %s243, %s230
        $region32: #{tpu_custom_call.1} parent=27 // pred_fallthru
          _
        // Predicated region
        $region33: #{tpu_custom_call.1} parent=27 // pred_check
          %p246 = pneg %p81
        $region34: #{tpu_custom_call.1} parent=27 // pred_check_branch
          %248 = sbr.rel (%p246) target = $region36
        $region35: #{tpu_custom_call.1} parent=27 // pred_region
          %s249 = sand.u32 %s21, 1
          %s250 = scalar_lea.sflag [#allocation6], %s249
          %s251 = sand.u32 %s71, 1
          %s252 = scalar_lea.vmem [#allocation5], %s251
          %254 = vsyncadd %s250, 0
          %s255 = scalar_lea.hbm %s1, %s28
          %s257 = sshll.u32 %s255, 4
          %s258 = int_to_ptr.hbm [resolvable:$true] %s257
          %s259 = sshll.u32 %s252, 4
          %s260 = int_to_ptr.vmem [resolvable:$true] %s259
          %262 = dma.hbm_to_vmem [thread:$0]  %s258, 16, %s260, %s250
        $region36: #{tpu_custom_call.1} parent=27 // pred_fallthru
          _
      $region28: #{tpu_custom_call.1} parent=5 // pred_fallthru
        _
      %p263 = scmp.le.s32.totalorder 1, %s21
      %p264 = scmp.lt.s32.totalorder %s21, 3
      %p265 = pnand %p263, %p264
      %p266 = pneg %p265
      // Predicated region
      $region37: #{tpu_custom_call.1} parent=5 // pred_check
        _
      $region38: #{tpu_custom_call.1} parent=5 // pred_check_branch
        %268 = sbr.rel (%p265) target = $region40
      $region39: #{tpu_custom_call.1} parent=5 // pred_region
        %s269 = ssub.s32 %s21, 1
        %s270 = sand.u32 %s48, 1
        %s271 = scalar_lea.sflag [#allocation3], %s270
        %s272 = sand.u32 %s48, 1
        %s273 = smul.addr %s272, 8
        %s274 = scalar_lea.vmem [#allocation2], %s273
        // Predicated region
        $region41: #{tpu_custom_call.1} parent=39 // pred_check
          %p275 = pneg %p61
        $region42: #{tpu_custom_call.1} parent=39 // pred_check_branch
          %277 = sbr.rel (%p275) target = $region44
        $region43: #{tpu_custom_call.1} parent=39 // pred_region
          %279 = dma.done %s271, 128
        $region44: #{tpu_custom_call.1} parent=39 // pred_fallthru
          _
        %s280 = sand.u32 %s26, 1
        %s281 = scalar_lea.sflag [#allocation6], %s280
        %s282 = sand.u32 %s74, 1
        %s283 = scalar_lea.vmem [#allocation5], %s282
        // Predicated region
        $region45: #{tpu_custom_call.1} parent=39 // pred_check
          %p284 = pneg %p87
        $region46: #{tpu_custom_call.1} parent=39 // pred_check_branch
          %286 = sbr.rel (%p284) target = $region48
        $region47: #{tpu_custom_call.1} parent=39 // pred_region
          %288 = dma.done %s281, 16
        $region48: #{tpu_custom_call.1} parent=39 // pred_fallthru
          _
        // Predicated region
        $region49: #{tpu_custom_call.1} parent=39 // pred_check
          %p289 = pneg %p108
        $region50: #{tpu_custom_call.1} parent=39 // pred_check_branch
          %291 = sbr.rel (%p289) target = $region52
        $region51: #{tpu_custom_call.1} parent=39 // pred_region
          %293 = dma.done [#allocation6], 32
        $region52: #{tpu_custom_call.1} parent=39 // pred_fallthru
          _
        // Predicated region
        $region53: #{tpu_custom_call.1} parent=39 // pred_check
          %p294 = pneg %p129
        $region54: #{tpu_custom_call.1} parent=39 // pred_check_branch
          %296 = sbr.rel (%p294) target = $region56
        $region55: #{tpu_custom_call.1} parent=39 // pred_region
          %298 = dma.done [#allocation9], 512
        $region56: #{tpu_custom_call.1} parent=39 // pred_fallthru
          _
        %s299 = sand.u32 %s48, 1
        %s300 = scalar_lea.sflag [#allocation3], %s299
        %s301 = sand.u32 %s48, 1
        %s302 = smul.addr %s301, 8
        %s303 = scalar_lea.vmem [#allocation2], %s302
        %p304 = pneg %p61
        %p305 = pneg %p58
        %s306 = sand.u32 %s26, 1
        %s307 = scalar_lea.sflag [#allocation6], %s306
        %s308 = sand.u32 %s74, 1
        %s309 = scalar_lea.vmem [#allocation5], %s308
        %p310 = pneg %p87
        %p311 = pneg %p84
        %p312 = pneg %p108
        %p313 = pneg %p105
        %p314 = pneg %p129
        %p315 = pneg %p126
        %p316 = pneg %p150
        %p317 = pneg %p147
        %p318 = pneg %p178
        %p319 = pneg %p175
        %s320 = sand.u32 %s165, 1
        %s321 = scalar_lea.sflag [#allocation4], %s320
        %s322 = sand.u32 %s165, 1
        %s323 = smul.addr %s322, 8
        %s324 = scalar_lea.vmem [#allocation10], %s323
        %v325 = vld [vmem:[%s274] sm:$0xff]
        %vm326 = vcmask 261120
        %v327 = vsel %vm326, %v325, 0.0
        %328 = vadd.xlane.f32.xlu0 %v327
        %v329 = vpop.xlane.xlu0 %328
        %v330 = vmul.f32 %v329, 0.03125
        %v331 = vmul.f32 %v325, %v325
        %v332 = vsel %vm326, %v331, 0.0
        %333 = vadd.xlane.f32.xlu0 %v332
        %v334 = vpop.xlane.xlu0 %333
        %v335 = vmul.f32 %v334, 0.03125
        %v336 = vmul.f32 %v330, %v330
        %v337 = vsub.f32 %v335, %v336
        %v338 = vadd.f32 %v337, 1e-06
        %v339 = vrsqrt.pop %v338
        %v340 = vmul.f32 %v339, %v338
        %v341 = vmul.f32 %v340, %v339
        %v342 = vmul.f32 0.5, %v341
        %v343 = vsub.f32 1.5, %v342
        %v344 = vmul.f32 %v339, %v343
        %vm345 = vweird.f32 %v338
        %vm346 = vweird.f32 %v339
        %vm347 = vmor %vm345, %vm346
        %v348 = vsel %vm347, %v339, %v344
        %v349 = vld [vmem:[%s283] sm:$0x1]
        %v350 = vld [vmem:[#allocation7] sm:$0x3]
        %v351 = vadd.f32 %v350, %v349
        %v352 = vadd.f32 %v350, 1.0
        %v354 = vperm.slane %v349, 0
        %v356 = vadd.f32 %v352, %v354
        %v357 = vperm.slane %v356, 1
        %v358 = vmul.f32 %v348, %v357
        %v359 = vmul.f32 %v325, %v358
        %v360 = vmul.f32 %v330, %v358
        %v361 = vperm.slane %v351, 0
        %v362 = vsub.f32 %v361, %v360
        %v363 = vadd.f32 %v359, %v362
        %v364 = vld [vmem:[#allocation8] sm:$0xff]
        %v365 = vld [vmem:[#allocation8 + $0x8] sm:$0xff]
        %v366 = vld [vmem:[#allocation8 + $0x10] sm:$0xff]
        %v367 = vld [vmem:[#allocation8 + $0x18] sm:$0xff]
        %v368 = vld [vmem:[%s4] sm:$0x1]
        %v370 = vperm.slane %v368, 0
        %v373 = vsel %vm326, %v363, 0
        %375 = vmatpush.msra.mxu0 0.0
        %376 = vmatpush.msra.mxu0 0.0
        %377 = vmatpush.msra.mxu0 0.0
        %378 = vmatpush.msra.mxu0 0.0
        %379 = vmatpush.msra.mxu0 0.0
        %380 = vmatpush.msra.mxu0 0.0
        %381 = vmatpush.msra.mxu0 0.0
        %382 = vmatpush.msra.mxu0 0.0
        %383 = vmatpush.msra.mxu0 0.0
        %384 = vmatpush.msra.mxu0 0.0
        %385 = vmatpush.msra.mxu0 0.0
        %386 = vmatpush.msra.mxu0 0.0
        %387 = vmatpush.msra.mxu0 %v367
        %388 = vmatpush.msra.mxu0 %v366
        %389 = vmatpush.msra.mxu0 %v365
        %390 = vmatpush.msra.mxu0 %v364
        %391 = vmatmul.f32.gmra.mxu0 %v373
        %v392 = vpop.f32.mrf.mxu0
        %v393 = vadd.f32 %v370, %v392
        %394 = vdwg.mxu0
        %395 = vst [vmem:[%s324] sm:$0xff] %v393
        %s396 = sand.u32 %s165, 1
        %s397 = scalar_lea.sflag [#allocation4], %s396
        %s398 = sand.u32 %s165, 1
        %s399 = smul.addr %s398, 8
        %s400 = scalar_lea.vmem [#allocation10], %s399
        // Predicated region
        $region57: #{tpu_custom_call.1} parent=39 // pred_check
          %p401 = pneg %p175
        $region58: #{tpu_custom_call.1} parent=39 // pred_check_branch
          %403 = sbr.rel (%p401) target = $region60
        $region59: #{tpu_custom_call.1} parent=39 // pred_region
          %405 = vsyncadd %s397, 0
          %s406 = sadd.s32 %s31, %s30
          %s407 = smul.addr %s406, 8
          %s408 = scalar_lea.hbm %s5, %s407
          %s410 = sshll.u32 %s400, 4
          %s411 = int_to_ptr.vmem [resolvable:$true] %s410
          %s412 = sshll.u32 %s408, 4
          %s413 = int_to_ptr.hbm [resolvable:$true] %s412
          %415 = dma.vmem_to_hbm [thread:$0]  %s411, 128, %s413, %s397
        $region60: #{tpu_custom_call.1} parent=39 // pred_fallthru
          _
      $region40: #{tpu_custom_call.1} parent=5 // pred_fallthru
        _
      %p416 = scmp.le.s32.totalorder 2, %s21
      // Predicated region
      $region61: #{tpu_custom_call.1} parent=5 // pred_check
        %p417 = pneg %p416
      $region62: #{tpu_custom_call.1} parent=5 // pred_check_branch
        %419 = sbr.rel (%p417) target = $region64
      $region63: #{tpu_custom_call.1} parent=5 // pred_region
        %s420 = ssub.s32 %s21, 2
        // Predicated region
        $region65: #{tpu_custom_call.1} parent=63 // pred_check
          %p421 = pneg %p181
        $region66: #{tpu_custom_call.1} parent=63 // pred_check_branch
          %423 = sbr.rel (%p421) target = $region68
        $region67: #{tpu_custom_call.1} parent=63 // pred_region
          %s424 = sand.u32 %s166, 1
          %s425 = scalar_lea.sflag [#allocation4], %s424
          %s426 = sand.u32 %s166, 1
          %s427 = smul.addr %s426, 8
          %s428 = scalar_lea.vmem [#allocation10], %s427
          %430 = dma.done %s425, 128
        $region68: #{tpu_custom_call.1} parent=63 // pred_fallthru
          _
      $region64: #{tpu_custom_call.1} parent=5 // pred_fallthru
        _
    $region6: #{tpu_custom_call.1} parent=1 // loop_footer
      %s25 = sadd.s32 1, %s21
    $region7: #{tpu_custom_call.1} parent=1 // loop_footer_branch
      %20 = sbr.rel target = $region3
    $region8: #{tpu_custom_call.1} parent=1 // loop_exit
      _
    %431 = vsyncpa [#allocation3], 1
    %s432 = scalar_lea.sflag [#allocation3], 1
    %433 = vsyncpa %s432, 1
    %434 = vsyncpa [#allocation6], 1
    %s435 = scalar_lea.sflag [#allocation6], 1
    %436 = vsyncpa %s435, 1
    %437 = vsyncpa [#allocation9], 1
    %438 = vsyncpa [#allocation4], 1
    %s439 = scalar_lea.sflag [#allocation4], 1
    %440 = vsyncpa %s439, 1

</llo_original>
